<compile_context>
chip_gen: v7x
topology: tpu7x:2x2x1
jax: 0.10.0
libtpu: 0.0.40
codegen_flags: <defaults>
</compile_context>

<pallas_src>
import functools

import jax
import jax.numpy as jnp
from jax import lax
from jax.experimental import pallas as pl
from jax.experimental.pallas import tpu as pltpu


def _pick_tile(total, target, align):
    """Largest divisor of `total` that is a multiple of `align` and <= target.

    Falls back to `total` (single block along that axis) if no such divisor
    exists, which keeps the (8,128)/full-dim block constraint satisfied.
    """
    if total <= target:
        return total
    best = total
    c = align
    while c <= target:
        if total % c == 0:
            best = c
        c += align
    return best if best <= target else total


def _sae_kernel(x_ref, wenc_ref, benc_ref, wdec_ref, bdec_ref,
                idx_ref, hid_ref, loss_ref,
                idx_acc, l1_acc,
                *, l1_coefficient, inv_batch):
    # grid = (batch tiles [parallel], hidden tiles [arbitrary/reduction])
    j = pl.program_id(1)
    nj = pl.num_programs(1)

    @pl.when(j == 0)
    def _init():
        idx_acc[...] = jnp.zeros_like(idx_acc)
        l1_acc[...] = jnp.zeros_like(l1_acc)

    # x' = x - b_dec. Elementwise math in f32 (only (TM, D) elements); the MXU
    # operand stays in storage dtype so bf16 inputs hit the MXU natively.
    bdec32 = bdec_ref[...].astype(jnp.float32)               # (1, D)
    xp32 = x_ref[...].astype(jnp.float32) - bdec32           # (TM, D) f32
    xp = xp32.astype(x_ref.dtype)                            # MXU operand

    # hidden_j = relu(x' @ W_enc[j]^T + b_enc[j]); W_enc kept in native (H, D)
    # layout — contract last dims directly, no materialized transpose.
    h = lax.dot_general(
        xp, wenc_ref[...],
        dimension_numbers=(((1,), (1,)), ((), ())),
        preferred_element_type=jnp.float32)                  # (TM, TH) f32
    h = jnp.maximum(h + benc_ref[...].astype(jnp.float32), 0.0)
    hid_ref[...] = h.astype(hid_ref.dtype)

    # Per-row L1 of hidden, accumulated as a raw sum across hidden tiles.
    l1_acc[...] += jnp.sum(jnp.abs(h), axis=-1, keepdims=True)

    # Partial decode: h @ W_dec[:, j]^T ; W_dec native (D, H) layout, block (D, TH).
    idx_acc[...] += lax.dot_general(
        h.astype(wdec_ref.dtype), wdec_ref[...],
        dimension_numbers=(((1,), (1,)), ((), ())),
        preferred_element_type=jnp.float32)                  # (TM, D) f32

    @pl.when(j == nj - 1)
    def _finalize():
        idx32 = idx_acc[...] + bdec32
        idx_ref[...] = idx32.astype(idx_ref.dtype)
        err = xp32 - idx32
        sse_rows = jnp.sum(err * err, axis=-1, keepdims=True)   # (TM, 1)
        # Per-row partial loss; summing over rows (in the wrapper) yields
        #   mean_B(sum_D err^2) + l1 * sum(|hidden|)   exactly.
        loss_ref[...] = (sse_rows * jnp.float32(inv_batch)
                         + jnp.float32(l1_coefficient) * l1_acc[...])


def sae_forward(x, w_enc, b_enc, w_dec, b_dec, *, l1_coefficient=0.01,
                tm_target=256, th_target=2048):
    """x: (B, D); w_enc: (H, D); b_enc: (H,); w_dec: (D, H); b_dec: (D,).

    tm_target/th_target: per-generation tile knobs. v6e/v5e: push th up to ~2048
    (amortize per-step overhead, large DMAs). v7x (64 MiB VMEM, 2 TCs): prefer
    th <= 1024; the "parallel" batch axis shards across the two TensorCores.
    """
    B, D = x.shape
    H = w_enc.shape[0]
    assert w_enc.shape == (H, D) and w_dec.shape == (D, H)
    assert b_enc.shape == (H,) and b_dec.shape == (D,)

    tm = _pick_tile(B, tm_target, 8)
    th = _pick_tile(H, th_target, 128)
    ni, nj = B // tm, H // th

    # Biases as (1, N) rows: free metadata reshape, clean lane broadcast.
    benc2 = b_enc.reshape(1, H)
    bdec2 = b_dec.reshape(1, D)

    kernel = functools.partial(
        _sae_kernel,
        l1_coefficient=float(l1_coefficient),
        inv_batch=1.0 / float(B))

    idx, hidden, loss_rows = pl.pallas_call(
        kernel,
        grid=(ni, nj),
        in_specs=[
            pl.BlockSpec((tm, D), lambda i, j: (i, 0)),     # x
            pl.BlockSpec((th, D), lambda i, j: (j, 0)),     # W_enc (native layout)
            pl.BlockSpec((1, th), lambda i, j: (0, j)),     # b_enc
            pl.BlockSpec((D, th), lambda i, j: (0, j)),     # W_dec (native layout)
            pl.BlockSpec((1, D), lambda i, j: (0, 0)),      # b_dec
        ],
        out_specs=(
            pl.BlockSpec((tm, D), lambda i, j: (i, 0)),     # idx (resident over j)
            pl.BlockSpec((tm, th), lambda i, j: (i, j)),    # hidden
            pl.BlockSpec((tm, 1), lambda i, j: (i, 0)),     # per-row loss partials
        ),
        out_shape=(
            jax.ShapeDtypeStruct((B, D), x.dtype),
            jax.ShapeDtypeStruct((B, H), x.dtype),
            jax.ShapeDtypeStruct((B, 1), jnp.float32),
        ),
        scratch_shapes=[
            pltpu.VMEM((tm, D), jnp.float32),               # idx accumulator
            pltpu.VMEM((tm, 1), jnp.float32),               # per-row L1 accumulator
        ],
        compiler_params=pltpu.CompilerParams(
            dimension_semantics=("parallel", "arbitrary"),
            vmem_limit_bytes=64 * 1024 * 1024,
        ),
    )(x, w_enc, benc2, w_dec, bdec2)

    loss = jnp.sum(loss_rows)   # exact: sum of per-row partials == l2_mean + l1*sparse
    return idx, loss, hidden


def _ref_forward(x, w_enc, b_enc, w_dec, b_dec, l1_coefficient):
    f32 = jnp.float32
    x, w_enc, b_enc = x.astype(f32), w_enc.astype(f32), b_enc.astype(f32)
    w_dec, b_dec = w_dec.astype(f32), b_dec.astype(f32)
    hp = lax.Precision.HIGHEST
    xp = x - b_dec
    h = jnp.maximum(jnp.dot(xp, w_enc.T, precision=hp) + b_enc, 0.0)
    sparse = jnp.sum(jnp.abs(h))
    idx = jnp.dot(h, w_dec.T, precision=hp) + b_dec
    l2 = jnp.mean(jnp.sum((xp - idx) ** 2, axis=-1))
    return idx, l2 + l1_coefficient * sparse, h


def _rel_err(got, want):
    got = jnp.asarray(got, jnp.float32)
    want = jnp.asarray(want, jnp.float32)
    return float(jnp.max(jnp.abs(got - want)) / (jnp.max(jnp.abs(want)) + 1e-6))


if __name__ == "__main__":
    # ---- Case 1: the module's default config (tiny, f32) ----
    input_size, hidden_size, l1_coefficient, batch = 5, 50, 0.01, 8
    key = jax.random.PRNGKey(0)
    kx, ke_w, ke_b, kd_w, kd_b = jax.random.split(key, 5)

    enc_bound = 1.0 / (input_size ** 0.5)
    dec_bound = 1.0 / (hidden_size ** 0.5)
    w_enc = jax.random.uniform(ke_w, (hidden_size, input_size),
                               minval=-enc_bound, maxval=enc_bound, dtype=jnp.float32)
    b_enc = jax.random.uniform(ke_b, (hidden_size,),
                               minval=-enc_bound, maxval=enc_bound, dtype=jnp.float32)
    w_dec = jax.random.uniform(kd_w, (input_size, hidden_size),
                               minval=-dec_bound, maxval=dec_bound, dtype=jnp.float32)
    b_dec = jax.random.uniform(kd_b, (input_size,),
                               minval=-dec_bound, maxval=dec_bound, dtype=jnp.float32)
    x = jax.random.normal(kx, (batch, input_size), dtype=jnp.float32)

    idx, loss, hidden = sae_forward(x, w_enc, b_enc, w_dec, b_dec,
                                    l1_coefficient=l1_coefficient)
    jax.block_until_ready((idx, loss, hidden))

    r_idx, r_loss, r_hidden = _ref_forward(x, w_enc, b_enc, w_dec, b_dec, l1_coefficient)
    assert _rel_err(idx, r_idx) < 1e-2, "idx mismatch (small case)"
    assert _rel_err(hidden, r_hidden) < 1e-2, "hidden mismatch (small case)"
    assert _rel_err(loss, r_loss) < 1e-2, "loss mismatch (small case)"

    # ---- Case 2: larger bf16 config that exercises the (batch, hidden) grid ----
    B2, D2, H2 = 256, 128, 512
    key2 = jax.random.PRNGKey(0)
    k2x, k2ew, k2eb, k2dw, k2db = jax.random.split(key2, 5)
    eb, db = 1.0 / (D2 ** 0.5), 1.0 / (H2 ** 0.5)
    w_enc2 = jax.random.uniform(k2ew, (H2, D2), minval=-eb, maxval=eb).astype(jnp.bfloat16)
    b_enc2 = jax.random.uniform(k2eb, (H2,), minval=-eb, maxval=eb).astype(jnp.bfloat16)
    w_dec2 = jax.random.uniform(k2dw, (D2, H2), minval=-db, maxval=db).astype(jnp.bfloat16)
    b_dec2 = jax.random.uniform(k2db, (D2,), minval=-db, maxval=db).astype(jnp.bfloat16)
    x2 = jax.random.normal(k2x, (B2, D2)).astype(jnp.bfloat16)

    idx2, loss2, hidden2 = sae_forward(x2, w_enc2, b_enc2, w_dec2, b_dec2,
                                       l1_coefficient=l1_coefficient,
                                       tm_target=128, th_target=256)  # grid (2, 2)
    jax.block_until_ready((idx2, loss2, hidden2))

    r_idx2, r_loss2, r_hidden2 = _ref_forward(x2, w_enc2, b_enc2, w_dec2, b_dec2,
                                              l1_coefficient)
    assert _rel_err(idx2, r_idx2) < 5e-2, "idx mismatch (bf16 gridded case)"
    assert _rel_err(hidden2, r_hidden2) < 5e-2, "hidden mismatch (bf16 gridded case)"
    assert _rel_err(loss2, r_loss2) < 5e-2, "loss mismatch (bf16 gridded case)"

    print("KERNEL_OK")
</pallas_src>

<mosaic_0001>
module attributes {stable_mosaic.version = 11 : i64} {
  func.func @_sae_kernel(%arg0: i32, %arg1: i32, %arg2: memref<8x5xf32, #tpu.memory_space<vmem>>, %arg3: memref<50x5xf32, #tpu.memory_space<vmem>>, %arg4: memref<1x50xf32, #tpu.memory_space<vmem>>, %arg5: memref<5x50xf32, #tpu.memory_space<vmem>>, %arg6: memref<1x5xf32, #tpu.memory_space<vmem>>, %arg7: memref<8x5xf32, #tpu.memory_space<vmem>>, %arg8: memref<8x50xf32, #tpu.memory_space<vmem>>, %arg9: memref<8x1xf32, #tpu.memory_space<vmem>>, %arg10: memref<8x5xf32, #tpu.memory_space<vmem>>, %arg11: memref<8x1xf32, #tpu.memory_space<vmem>>) attributes {dimension_semantics = [#tpu.dimension_semantics<parallel>, #tpu.dimension_semantics<arbitrary>], iteration_bounds = array<i64: 1, 1>, scalar_prefetch = 0 : i64, scratch_operands = 2 : i64, tpu.core_type = #tpu.core_type<tc>, window_params = [{transform_indices = @transform_0, window_bounds = array<i64: 8, 5>}, {transform_indices = @transform_1, window_bounds = array<i64: 50, 5>}, {transform_indices = @transform_2, window_bounds = array<i64: 1, 50>}, {transform_indices = @transform_3, window_bounds = array<i64: 5, 50>}, {pipeline_mode = #tpu.pipeline_mode<synchronous>, transform_indices = @transform_4, window_bounds = array<i64: 1, 5>}, {transform_indices = @transform_5, window_bounds = array<i64: 8, 5>}, {transform_indices = @transform_6, window_bounds = array<i64: 8, 50>}, {transform_indices = @transform_7, window_bounds = array<i64: 8, 1>}]} {
    %c0_i32 = arith.constant 0 : i32
    %0 = arith.cmpi eq, %arg1, %c0_i32 : i32
    %1 = arith.extui %0 : i1 to i32
    %c0_i32_0 = arith.constant 0 : i32
    %2 = arith.cmpi ne, %1, %c0_i32_0 : i32
    scf.if %2 {
      %cst_25 = arith.constant 0.000000e+00 : f32
      %29 = vector.broadcast %cst_25 : f32 to vector<8x5xf32>
      %c0_26 = arith.constant 0 : index
      %c0_27 = arith.constant 0 : index
      %30 = vector.load %arg10[%c0_26, %c0_27] : memref<8x5xf32, #tpu.memory_space<vmem>>, vector<8x5xf32>
      tpu.vector_store %arg10[%c0_26, %c0_27], %29 {strides = array<i32>} : memref<8x5xf32, #tpu.memory_space<vmem>>, vector<8x5xf32>,
      %cst_28 = arith.constant 0.000000e+00 : f32
      %31 = vector.broadcast %cst_28 : f32 to vector<8x1xf32>
      %c0_29 = arith.constant 0 : index
      %c0_30 = arith.constant 0 : index
      %32 = vector.load %arg11[%c0_29, %c0_30] : memref<8x1xf32, #tpu.memory_space<vmem>>, vector<8x1xf32>
      tpu.vector_store %arg11[%c0_29, %c0_30], %31 {strides = array<i32>} : memref<8x1xf32, #tpu.memory_space<vmem>>, vector<8x1xf32>,
    } else {
    }
    %c0 = arith.constant 0 : index
    %c0_1 = arith.constant 0 : index
    %3 = vector.load %arg6[%c0, %c0_1] : memref<1x5xf32, #tpu.memory_space<vmem>>, vector<1x5xf32>
    %c0_2 = arith.constant 0 : index
    %c0_3 = arith.constant 0 : index
    %4 = vector.load %arg2[%c0_2, %c0_3] : memref<8x5xf32, #tpu.memory_space<vmem>>, vector<8x5xf32>
    %5 = vector.broadcast %3 : vector<1x5xf32> to vector<8x5xf32>
    %6 = arith.subf %4, %5 : vector<8x5xf32>
    %c0_4 = arith.constant 0 : index
    %c0_5 = arith.constant 0 : index
    %7 = vector.load %arg3[%c0_4, %c0_5] : memref<50x5xf32, #tpu.memory_space<vmem>>, vector<50x5xf32>
    %cst = arith.constant dense<0.000000e+00> : vector<8x50xf32>
    %8 = tpu.matmul %6, %7, %cst {dimension_numbers = #tpu.dot_dimension_numbers<[1], [1], [0], [0], [0, 0, 1, 0], [], []>} : vector<8x5xf32>, vector<50x5xf32>, vector<8x50xf32> -> vector<8x50xf32>
    %c0_6 = arith.constant 0 : index
    %c0_7 = arith.constant 0 : index
    %9 = vector.load %arg4[%c0_6, %c0_7] : memref<1x50xf32, #tpu.memory_space<vmem>>, vector<1x50xf32>
    %10 = vector.broadcast %9 : vector<1x50xf32> to vector<8x50xf32>
    %11 = arith.addf %8, %10 : vector<8x50xf32>
    %cst_8 = arith.constant 0.000000e+00 : f32
    %12 = vector.broadcast %cst_8 : f32 to vector<8x50xf32>
    %13 = arith.maximumf %11, %12 : vector<8x50xf32>
    %c0_9 = arith.constant 0 : index
    %c0_10 = arith.constant 0 : index
    %14 = vector.load %arg8[%c0_9, %c0_10] : memref<8x50xf32, #tpu.memory_space<vmem>>, vector<8x50xf32>
    tpu.vector_store %arg8[%c0_9, %c0_10], %13 {strides = array<i32>} : memref<8x50xf32, #tpu.memory_space<vmem>>, vector<8x50xf32>,
    %c0_11 = arith.constant 0 : index
    %c0_12 = arith.constant 0 : index
    %15 = vector.load %arg11[%c0_11, %c0_12] : memref<8x1xf32, #tpu.memory_space<vmem>>, vector<8x1xf32>
    %16 = math.absf %13 : vector<8x50xf32>
    %cst_13 = arith.constant dense<0.000000e+00> : vector<8xf32>
    %17 = vector.multi_reduction <add>, %16, %cst_13 [1] : vector<8x50xf32> to vector<8xf32>
    %18 = vector.shape_cast %17 : vector<8xf32> to vector<8x1xf32>
    %19 = arith.addf %15, %18 : vector<8x1xf32>
    %c0_14 = arith.constant 0 : index
    %c0_15 = arith.constant 0 : index
    %20 = vector.load %arg11[%c0_14, %c0_15] : memref<8x1xf32, #tpu.memory_space<vmem>>, vector<8x1xf32>
    tpu.vector_store %arg11[%c0_14, %c0_15], %19 {strides = array<i32>} : memref<8x1xf32, #tpu.memory_space<vmem>>, vector<8x1xf32>,
    %c0_16 = arith.constant 0 : index
    %c0_17 = arith.constant 0 : index
    %21 = vector.load %arg10[%c0_16, %c0_17] : memref<8x5xf32, #tpu.memory_space<vmem>>, vector<8x5xf32>
    %c0_18 = arith.constant 0 : index
    %c0_19 = arith.constant 0 : index
    %22 = vector.load %arg5[%c0_18, %c0_19] : memref<5x50xf32, #tpu.memory_space<vmem>>, vector<5x50xf32>
    %cst_20 = arith.constant dense<0.000000e+00> : vector<8x5xf32>
    %23 = tpu.matmul %13, %22, %cst_20 {dimension_numbers = #tpu.dot_dimension_numbers<[1], [1], [0], [0], [0, 0, 1, 0], [], []>} : vector<8x50xf32>, vector<5x50xf32>, vector<8x5xf32> -> vector<8x5xf32>
    %24 = arith.addf %21, %23 : vector<8x5xf32>
    %c0_21 = arith.constant 0 : index
    %c0_22 = arith.constant 0 : index
    %25 = vector.load %arg10[%c0_21, %c0_22] : memref<8x5xf32, #tpu.memory_space<vmem>>, vector<8x5xf32>
    tpu.vector_store %arg10[%c0_21, %c0_22], %24 {strides = array<i32>} : memref<8x5xf32, #tpu.memory_space<vmem>>, vector<8x5xf32>,
    %c0_i32_23 = arith.constant 0 : i32
    %26 = arith.cmpi eq, %arg1, %c0_i32_23 : i32
    %27 = arith.extui %26 : i1 to i32
    %c0_i32_24 = arith.constant 0 : i32
    %28 = arith.cmpi ne, %27, %c0_i32_24 : i32
    scf.if %28 {
      %c0_25 = arith.constant 0 : index
      %c0_26 = arith.constant 0 : index
      %29 = vector.load %arg10[%c0_25, %c0_26] : memref<8x5xf32, #tpu.memory_space<vmem>>, vector<8x5xf32>
      %30 = vector.broadcast %3 : vector<1x5xf32> to vector<8x5xf32>
      %31 = arith.addf %29, %30 : vector<8x5xf32>
      %c0_27 = arith.constant 0 : index
      %c0_28 = arith.constant 0 : index
      %32 = vector.load %arg7[%c0_27, %c0_28] : memref<8x5xf32, #tpu.memory_space<vmem>>, vector<8x5xf32>
      tpu.vector_store %arg7[%c0_27, %c0_28], %31 {strides = array<i32>} : memref<8x5xf32, #tpu.memory_space<vmem>>, vector<8x5xf32>,
      %33 = arith.subf %6, %31 : vector<8x5xf32>
      %34 = arith.mulf %33, %33 : vector<8x5xf32>
      %cst_29 = arith.constant dense<0.000000e+00> : vector<8xf32>
      %35 = vector.multi_reduction <add>, %34, %cst_29 [1] : vector<8x5xf32> to vector<8xf32>
      %36 = vector.shape_cast %35 : vector<8xf32> to vector<8x1xf32>
      %cst_30 = arith.constant 1.250000e-01 : f32
      %37 = vector.broadcast %cst_30 : f32 to vector<8x1xf32>
      %38 = arith.mulf %36, %37 : vector<8x1xf32>
      %c0_31 = arith.constant 0 : index
      %c0_32 = arith.constant 0 : index
      %39 = vector.load %arg11[%c0_31, %c0_32] : memref<8x1xf32, #tpu.memory_space<vmem>>, vector<8x1xf32>
      %cst_33 = arith.constant 0.00999999977 : f32
      %40 = vector.broadcast %cst_33 : f32 to vector<8x1xf32>
      %41 = arith.mulf %40, %39 : vector<8x1xf32>
      %42 = arith.addf %38, %41 : vector<8x1xf32>
      %c0_34 = arith.constant 0 : index
      %c0_35 = arith.constant 0 : index
      %43 = vector.load %arg9[%c0_34, %c0_35] : memref<8x1xf32, #tpu.memory_space<vmem>>, vector<8x1xf32>
      tpu.vector_store %arg9[%c0_34, %c0_35], %42 {strides = array<i32>} : memref<8x1xf32, #tpu.memory_space<vmem>>, vector<8x1xf32>,
    } else {
    }
    return
  }
  func.func @transform_0(%arg0: i32, %arg1: i32) -> (i32, i32) {
    %c0_i32 = arith.constant 0 : i32
    %c0_i32_0 = arith.constant 0 : i32
    return %arg0, %c0_i32 : i32, i32
  }
  func.func @transform_1(%arg0: i32, %arg1: i32) -> (i32, i32) {
    %c0_i32 = arith.constant 0 : i32
    %c0_i32_0 = arith.constant 0 : i32
    return %arg1, %c0_i32 : i32, i32
  }
  func.func @transform_2(%arg0: i32, %arg1: i32) -> (i32, i32) {
    %c0_i32 = arith.constant 0 : i32
    %c0_i32_0 = arith.constant 0 : i32
    return %c0_i32, %arg1 : i32, i32
  }
  func.func @transform_3(%arg0: i32, %arg1: i32) -> (i32, i32) {
    %c0_i32 = arith.constant 0 : i32
    %c0_i32_0 = arith.constant 0 : i32
    return %c0_i32, %arg1 : i32, i32
  }
  func.func @transform_4(%arg0: i32, %arg1: i32) -> (i32, i32) {
    %c0_i32 = arith.constant 0 : i32
    %c0_i32_0 = arith.constant 0 : i32
    %c0_i32_1 = arith.constant 0 : i32
    return %c0_i32, %c0_i32_0 : i32, i32
  }
  func.func @transform_5(%arg0: i32, %arg1: i32) -> (i32, i32) {
    %c0_i32 = arith.constant 0 : i32
    %c0_i32_0 = arith.constant 0 : i32
    return %arg0, %c0_i32 : i32, i32
  }
  func.func @transform_6(%arg0: i32, %arg1: i32) -> (i32, i32) {
    %c0_i32 = arith.constant 0 : i32
    return %arg0, %arg1 : i32, i32
  }
  func.func @transform_7(%arg0: i32, %arg1: i32) -> (i32, i32) {
    %c0_i32 = arith.constant 0 : i32
    %c0_i32_0 = arith.constant 0 : i32
    return %arg0, %c0_i32 : i32, i32
  }
}

</mosaic_0001>

<llo_original>
// kernel: tpu_custom_call.1
$region0: #{tpu_custom_call.1}
  #allocation0 [shape = 'u32[]', space=smem, size = 0x4, offset = 0x4, fixed_abs, tag = 'smem constant byte address 0x4 - core index']
  #allocation1 [shape = 'u32[144,128]{1,0:T(1,128)}', space=vmem, size = 0x12000, scoped, tag = 'internal scratch']
  #allocation2 [shape = 'f32[8,5]{1,0:T(8,128)}', space=vmem, size = 0x1000, scoped, tag = 'scratch operand']
  #allocation3 [shape = 'f32[8,1]{1,0:T(8,128)}', space=vmem, size = 0x1000, scoped, tag = 'scratch operand']
  %s0 = inlined_call_operand.hbm [shape: f32[8,5], index: 0, kind: input, shape index: {}]
  %s1 = inlined_call_operand.hbm [shape: f32[50,5], index: 1, kind: input, shape index: {}]
  %s2 = inlined_call_operand.hbm [shape: f32[1,50], index: 2, kind: input, shape index: {}]
  %s3 = inlined_call_operand.hbm [shape: f32[5,50], index: 3, kind: input, shape index: {}]
  %s4 = inlined_call_operand.hbm [shape: f32[1,5], index: 4, kind: input, shape index: {}]
  %s5 = inlined_call_operand.hbm [shape: f32[8,5], index: 5, kind: output, shape index: {0}]
  %s6 = inlined_call_operand.hbm [shape: f32[8,50], index: 6, kind: output, shape index: {1}]
  %s7 = inlined_call_operand.hbm [shape: f32[8,1], index: 7, kind: output, shape index: {2}]
  %8 = xla_tuple %s5, %s6, %s7
  %s9 = sld [smem:[#allocation0]]
  $region74: #{tpu_custom_call.1} parent=0
    _
  %s11 = ssub.s32 1, %s9
  %s12 = scalar_select 0, %s11, %s9
  $region1: #{tpu_custom_call.1} parent=0
    #allocation4 [shape = 'u8[4096]{0}', space=vmem, size = 0x1000, scoped, tag = 'input window, operand 0, single buffered']
    #allocation5 [shape = 's32[1]{0}', space=sflag, size = 0x4, scoped, tag = 'scoped memory for tpu_custom_call.1']
    #allocation6 [shape = 's32[1]{0}', space=sflag, size = 0x4, scoped, tag = 'scoped memory for tpu_custom_call.1']
    #allocation7 [shape = 'u8[28672]{0}', space=vmem, size = 0x7000, scoped, tag = 'input window, operand 1, single buffered']
    #allocation8 [shape = 's32[1]{0}', space=sflag, size = 0x4, scoped, tag = 'scoped memory for tpu_custom_call.1']
    #allocation9 [shape = 'u8[512]{0}', space=vmem, size = 0x400, scoped, tag = 'input window, operand 2, single buffered']
    #allocation10 [shape = 'u8[4096]{0}', space=vmem, size = 0x1000, scoped, tag = 'input window, operand 3, single buffered']
    #allocation11 [shape = 's32[1]{0}', space=sflag, size = 0x4, scoped, tag = 'scoped memory for tpu_custom_call.1']
    #allocation12 [shape = 'u8[512]{0}', space=vmem, size = 0x400, scoped, tag = 'input window, operand 4, single buffered']
    #allocation13 [shape = 'u8[4096]{0}', space=vmem, size = 0x1000, scoped, tag = 'output window, operand 0, single buffered']
    #allocation14 [shape = 'u8[4096]{0}', space=vmem, size = 0x1000, scoped, tag = 'output window, operand 1, single buffered']
    #allocation15 [shape = 's32[1]{0}', space=sflag, size = 0x4, scoped, tag = 'scoped memory for tpu_custom_call.1']
    #allocation16 [shape = 'u8[4096]{0}', space=vmem, size = 0x1000, scoped, tag = 'output window, operand 2, single buffered']
    %13 = vsyncpa [#allocation5], 0
    %14 = vsyncpa [#allocation8], 0
    %15 = vsyncpa [#allocation11], 0
    %16 = vsyncpa [#allocation6], 0
    %17 = vsyncpa [#allocation15], 0
    // Predicated region
    $region2: #{tpu_custom_call.1} parent=1 // pred_check
      _
    $region3: #{tpu_custom_call.1} parent=1 // pred_check_branch
      %19 = sbr.rel (0) target = $region5
    $region4: #{tpu_custom_call.1} parent=1 // pred_region
      %s21 = ssub.s32 128, 128
      %22 = vsyncadd [#allocation5], %s21
      %s24 = sshll.u32 [#allocation4], 4
      %s25 = int_to_ptr.vmem [resolvable:$true] %s24
      %27 = dma.hbm_to_vmem [thread:$0]  %s0, 128, %s25, [#allocation5]
    $region5: #{tpu_custom_call.1} parent=1 // pred_fallthru
      _
    // Predicated region
    $region6: #{tpu_custom_call.1} parent=1 // pred_check
      _
    $region7: #{tpu_custom_call.1} parent=1 // pred_check_branch
      %29 = sbr.rel (0) target = $region9
    $region8: #{tpu_custom_call.1} parent=1 // pred_region
      %s31 = ssub.s32 896, 896
      %32 = vsyncadd [#allocation8], %s31
      %s33 = sshll.u32 [#allocation7], 4
      %s34 = int_to_ptr.vmem [resolvable:$true] %s33
      %39 = dma.hbm_to_vmem [thread:$0]  %s1, 896, %s34, [#allocation8], 128, 128, 8
    $region9: #{tpu_custom_call.1} parent=1 // pred_fallthru
      _
    // Predicated region
    $region10: #{tpu_custom_call.1} parent=1 // pred_check
      _
    $region11: #{tpu_custom_call.1} parent=1 // pred_check_branch
      %41 = sbr.rel (0) target = $region13
    $region12: #{tpu_custom_call.1} parent=1 // pred_region
      %s43 = ssub.s32 16, 16
      %44 = vsyncadd [#allocation8], %s43
      %s46 = sshll.u32 [#allocation9], 4
      %s47 = int_to_ptr.vmem [resolvable:$true] %s46
      %49 = dma.hbm_to_vmem [thread:$0]  %s2, 16, %s47, [#allocation8]
    $region13: #{tpu_custom_call.1} parent=1 // pred_fallthru
      _
    // Predicated region
    $region14: #{tpu_custom_call.1} parent=1 // pred_check
      _
    $region15: #{tpu_custom_call.1} parent=1 // pred_check_branch
      %51 = sbr.rel (0) target = $region17
    $region16: #{tpu_custom_call.1} parent=1 // pred_region
      %s53 = ssub.s32 128, 128
      %54 = vsyncadd [#allocation11], %s53
      %s56 = sshll.u32 [#allocation10], 4
      %s57 = int_to_ptr.vmem [resolvable:$true] %s56
      %59 = dma.hbm_to_vmem [thread:$0]  %s3, 128, %s57, [#allocation11]
    $region17: #{tpu_custom_call.1} parent=1 // pred_fallthru
      _
    // Predicated region
    $region18: #{tpu_custom_call.1} parent=1 // pred_check
      _
    $region19: #{tpu_custom_call.1} parent=1 // pred_check_branch
      %61 = sbr.rel (0) target = $region21
    $region20: #{tpu_custom_call.1} parent=1 // pred_region
      %s63 = ssub.s32 16, 16
      %64 = vsyncadd [#allocation11], %s63
      %s66 = sshll.u32 [#allocation12], 4
      %s67 = int_to_ptr.vmem [resolvable:$true] %s66
      %69 = dma.hbm_to_vmem [thread:$0]  %s4, 16, %s67, [#allocation11]
    $region21: #{tpu_custom_call.1} parent=1 // pred_fallthru
      _
    // Predicated region
    $region22: #{tpu_custom_call.1} parent=1 // pred_check
      _
    $region23: #{tpu_custom_call.1} parent=1 // pred_check_branch
      %71 = sbr.rel (0) target = $region25
    $region24: #{tpu_custom_call.1} parent=1 // pred_region
      %72 = dma.done [#allocation5], 128
    $region25: #{tpu_custom_call.1} parent=1 // pred_fallthru
      _
    // Predicated region
    $region26: #{tpu_custom_call.1} parent=1 // pred_check
      _
    $region27: #{tpu_custom_call.1} parent=1 // pred_check_branch
      %74 = sbr.rel (0) target = $region29
    $region28: #{tpu_custom_call.1} parent=1 // pred_region
      %75 = dma.done [#allocation8], 896
    $region29: #{tpu_custom_call.1} parent=1 // pred_fallthru
      _
    // Predicated region
    $region30: #{tpu_custom_call.1} parent=1 // pred_check
      _
    $region31: #{tpu_custom_call.1} parent=1 // pred_check_branch
      %77 = sbr.rel (0) target = $region33
    $region32: #{tpu_custom_call.1} parent=1 // pred_region
      %78 = dma.done [#allocation8], 16
    $region33: #{tpu_custom_call.1} parent=1 // pred_fallthru
      _
    // Predicated region
    $region34: #{tpu_custom_call.1} parent=1 // pred_check
      _
    $region35: #{tpu_custom_call.1} parent=1 // pred_check_branch
      %80 = sbr.rel (0) target = $region37
    $region36: #{tpu_custom_call.1} parent=1 // pred_region
      %81 = dma.done [#allocation11], 128
    $region37: #{tpu_custom_call.1} parent=1 // pred_fallthru
      _
    // Predicated region
    $region38: #{tpu_custom_call.1} parent=1 // pred_check
      _
    $region39: #{tpu_custom_call.1} parent=1 // pred_check_branch
      %83 = sbr.rel (0) target = $region41
    $region40: #{tpu_custom_call.1} parent=1 // pred_region
      %84 = dma.done [#allocation11], 16
    $region41: #{tpu_custom_call.1} parent=1 // pred_fallthru
      _
    %p85 = scmp.eq.s32.totalorder 0, 0
    // Predicated region
    $region42: #{tpu_custom_call.1} parent=1 // pred_check
      %p86 = pneg %p85
    $region43: #{tpu_custom_call.1} parent=1 // pred_check_branch
      %88 = sbr.rel (%p86) target = $region45
    $region44: #{tpu_custom_call.1} parent=1 // pred_region
      %vm89 = vcmask 39936
      %90 = vst.msk [vmem:[#allocation2] sm:$0xff] %vm89, 0.0
      %vm91 = vcmask 7168
      %92 = vst.msk [vmem:[#allocation3] sm:$0xff] %vm91, 0.0
    $region45: #{tpu_custom_call.1} parent=1 // pred_fallthru
      _
    %v93 = vld [vmem:[#allocation12] sm:$0x1]
    %v94 = vld [vmem:[#allocation4] sm:$0xff]
    %v96 = vlaneseq
    %v97 = vshrl.u32 %v96, 7
    %v98 = vsub.s32 0, %v97
    %v99 = vrot.slane %v93, %v98
    %v101 = vsub.f32 %v94, %v99
    %v102 = vld [vmem:[#allocation7] sm:$0xff]
    %v103 = vld [vmem:[#allocation7 + $0x8] sm:$0xff]
    %v104 = vld [vmem:[#allocation7 + $0x10] sm:$0xff]
    %v105 = vld [vmem:[#allocation7 + $0x18] sm:$0xff]
    %v106 = vld [vmem:[#allocation7 + $0x20] sm:$0xff]
    %v107 = vld [vmem:[#allocation7 + $0x28] sm:$0xff]
    %v108 = vld [vmem:[#allocation7 + $0x30] sm:$0x3]
    %v109 = vld [vmem:[#allocation9] sm:$0x1]
    %v111 = vlaneseq
    %v112 = vshrl.u32 %v111, 7
    %v113 = vsub.s32 0, %v112
    %v114 = vrot.slane %v109, %v113
    %vm116 = vcmask 39936
    %v118 = vsel %vm116, %v101, 0
    %v121 = vsel %vm116, %v102, 0
    %v124 = vsel %vm116, %v103, 0
    %v127 = vsel %vm116, %v104, 0
    %v130 = vsel %vm116, %v105, 0
    %v133 = vsel %vm116, %v106, 0
    %v136 = vsel %vm116, %v107, 0
    %v139 = vsel %vm116, %v108, 0
    %141 = vmatprep.subr.mxu0 0.0
    %142 = vmatpush1.xpose.msra.mxu0 %v121
    %143 = vmatprep.subr.mxu0 0.0
    %144 = vmatpush1.xpose.msra.mxu0 %v124
    %145 = vmatprep.subr.mxu0 0.0
    %146 = vmatpush1.xpose.msra.mxu0 %v127
    %147 = vmatprep.subr.mxu0 0.0
    %148 = vmatpush1.xpose.msra.mxu0 %v130
    %149 = vmatprep.subr.mxu0 0.0
    %150 = vmatpush1.xpose.msra.mxu0 %v133
    %151 = vmatprep.subr.mxu0 0.0
    %152 = vmatpush1.xpose.msra.mxu0 %v136
    %153 = vmatprep.subr.mxu0 0.0
    %154 = vmatpush1.xpose.msra.mxu0 %v139
    %155 = vmatprep.subr.mxu0 0.0
    %156 = vmatpush1.xpose.msra.mxu0 0.0
    %157 = vmatprep.subr.mxu0 0.0
    %158 = vmatpush1.xpose.msra.mxu0 0.0
    %159 = vmatprep.subr.mxu0 0.0
    %160 = vmatpush1.xpose.msra.mxu0 0.0
    %161 = vmatprep.subr.mxu0 0.0
    %162 = vmatpush1.xpose.msra.mxu0 0.0
    %163 = vmatprep.subr.mxu0 0.0
    %164 = vmatpush1.xpose.msra.mxu0 0.0
    %165 = vmatprep.subr.mxu0 0.0
    %166 = vmatpush1.xpose.msra.mxu0 0.0
    %167 = vmatprep.subr.mxu0 0.0
    %168 = vmatpush1.xpose.msra.mxu0 0.0
    %169 = vmatprep.subr.mxu0 0.0
    %170 = vmatpush1.xpose.msra.mxu0 0.0
    %171 = vmatprep.subr.mxu0 0.0
    %172 = vmatpush1.xpose.msra.mxu0 0.0
    %173 = vmatprep.subr.mxu0 0.0
    %174 = vmatpush1.xpose.msra.mxu0 0.0
    %175 = vmatprep.subr.mxu0 0.0
    %176 = vmatpush1.xpose.msra.mxu0 0.0
    %177 = vmatprep.subr.mxu0 0.0
    %178 = vmatpush1.xpose.msra.mxu0 0.0
    %179 = vmatprep.subr.mxu0 0.0
    %180 = vmatpush1.xpose.msra.mxu0 0.0
    %181 = vmatprep.subr.mxu0 0.0
    %182 = vmatpush1.xpose.msra.mxu0 0.0
    %183 = vmatprep.subr.mxu0 0.0
    %184 = vmatpush1.xpose.msra.mxu0 0.0
    %185 = vmatprep.subr.mxu0 0.0
    %186 = vmatpush1.xpose.msra.mxu0 0.0
    %187 = vmatprep.subr.mxu0 0.0
    %188 = vmatpush1.xpose.msra.mxu0 0.0
    %189 = vmatprep.subr.mxu0 0.0
    %190 = vmatpush1.xpose.msra.mxu0 0.0
    %191 = vmatprep.subr.mxu0 0.0
    %192 = vmatpush1.xpose.msra.mxu0 0.0
    %193 = vmatprep.subr.mxu0 0.0
    %194 = vmatpush1.xpose.msra.mxu0 0.0
    %195 = vmatprep.subr.mxu0 0.0
    %196 = vmatpush1.xpose.msra.mxu0 0.0
    %197 = vmatprep.subr.mxu0 0.0
    %198 = vmatpush1.xpose.msra.mxu0 0.0
    %199 = vmatprep.subr.mxu0 0.0
    %200 = vmatpush1.xpose.msra.mxu0 0.0
    %201 = vmatprep.subr.mxu0 0.0
    %202 = vmatpush1.xpose.msra.mxu0 0.0
    %203 = vmatprep.subr.mxu0 0.0
    %204 = vmatpush1.xpose.msra.mxu0 0.0
    %205 = vmatprep.mubr.f32.mxu0 0.0
    %206 = vmatmul.mubr.f32.gmra.mrb[0].mxu0 %v118
    %v207 = vpop.f32.mrb[0].mxu0
    %v208 = vadd.f32 %v114, %v207
    %v209 = vpop.f32.mrb[0].mxu0
    %210 = vdwg.mxu0
    %v211 = vmax.f32 %v208, 0.0
    %vm212 = vcmask 408576
    %213 = vst.msk [vmem:[#allocation14] sm:$0xff] %vm212, %v211
    %v214 = vld [vmem:[#allocation3] sm:$0xff]
    %v215 = vand.u32 2147483647, %v211
    %v216 = vsel %vm212, %v215, 0.0
    %217 = vadd.xlane.f32.xlu0 %v216
    %v218 = vpop.xlane.xlu0 %217
    %v219 = vadd.f32 %v214, %v218
    %vm220 = vcmask 7168
    %221 = vst.msk [vmem:[#allocation3] sm:$0xff] %vm220, %v219
    %v222 = vld [vmem:[#allocation2] sm:$0xff]
    %v223 = vld [vmem:[#allocation10] sm:$0x1f]
    %v225 = vsel %vm212, %v211, 0
    %v228 = vsel %vm212, %v223, 0
    %230 = vmatprep.subr.mxu0 0.0
    %231 = vmatpush1.xpose.msra.mxu0 %v228
    %232 = vmatprep.subr.mxu0 0.0
    %233 = vmatpush1.xpose.msra.mxu0 0.0
    %234 = vmatprep.subr.mxu0 0.0
    %235 = vmatpush1.xpose.msra.mxu0 0.0
    %236 = vmatprep.subr.mxu0 0.0
    %237 = vmatpush1.xpose.msra.mxu0 0.0
    %238 = vmatprep.subr.mxu0 0.0
    %239 = vmatpush1.xpose.msra.mxu0 0.0
    %240 = vmatprep.subr.mxu0 0.0
    %241 = vmatpush1.xpose.msra.mxu0 0.0
    %242 = vmatprep.subr.mxu0 0.0
    %243 = vmatpush1.xpose.msra.mxu0 0.0
    %244 = vmatprep.subr.mxu0 0.0
    %245 = vmatpush1.xpose.msra.mxu0 0.0
    %246 = vmatprep.subr.mxu0 0.0
    %247 = vmatpush1.xpose.msra.mxu0 0.0
    %248 = vmatprep.subr.mxu0 0.0
    %249 = vmatpush1.xpose.msra.mxu0 0.0
    %250 = vmatprep.subr.mxu0 0.0
    %251 = vmatpush1.xpose.msra.mxu0 0.0
    %252 = vmatprep.subr.mxu0 0.0
    %253 = vmatpush1.xpose.msra.mxu0 0.0
    %254 = vmatprep.subr.mxu0 0.0
    %255 = vmatpush1.xpose.msra.mxu0 0.0
    %256 = vmatprep.subr.mxu0 0.0
    %257 = vmatpush1.xpose.msra.mxu0 0.0
    %258 = vmatprep.subr.mxu0 0.0
    %259 = vmatpush1.xpose.msra.mxu0 0.0
    %260 = vmatprep.subr.mxu0 0.0
    %261 = vmatpush1.xpose.msra.mxu0 0.0
    %262 = vmatprep.subr.mxu0 0.0
    %263 = vmatpush1.xpose.msra.mxu0 0.0
    %264 = vmatprep.subr.mxu0 0.0
    %265 = vmatpush1.xpose.msra.mxu0 0.0
    %266 = vmatprep.subr.mxu0 0.0
    %267 = vmatpush1.xpose.msra.mxu0 0.0
    %268 = vmatprep.subr.mxu0 0.0
    %269 = vmatpush1.xpose.msra.mxu0 0.0
    %270 = vmatprep.subr.mxu0 0.0
    %271 = vmatpush1.xpose.msra.mxu0 0.0
    %272 = vmatprep.subr.mxu0 0.0
    %273 = vmatpush1.xpose.msra.mxu0 0.0
    %274 = vmatprep.subr.mxu0 0.0
    %275 = vmatpush1.xpose.msra.mxu0 0.0
    %276 = vmatprep.subr.mxu0 0.0
    %277 = vmatpush1.xpose.msra.mxu0 0.0
    %278 = vmatprep.subr.mxu0 0.0
    %279 = vmatpush1.xpose.msra.mxu0 0.0
    %280 = vmatprep.subr.mxu0 0.0
    %281 = vmatpush1.xpose.msra.mxu0 0.0
    %282 = vmatprep.subr.mxu0 0.0
    %283 = vmatpush1.xpose.msra.mxu0 0.0
    %284 = vmatprep.subr.mxu0 0.0
    %285 = vmatpush1.xpose.msra.mxu0 0.0
    %286 = vmatprep.subr.mxu0 0.0
    %287 = vmatpush1.xpose.msra.mxu0 0.0
    %288 = vmatprep.subr.mxu0 0.0
    %289 = vmatpush1.xpose.msra.mxu0 0.0
    %290 = vmatprep.subr.mxu0 0.0
    %291 = vmatpush1.xpose.msra.mxu0 0.0
    %292 = vmatprep.subr.mxu0 0.0
    %293 = vmatpush1.xpose.msra.mxu0 0.0
    %294 = vmatprep.mubr.f32.mxu0 0.0
    %295 = vmatmul.mubr.f32.gmra.mrb[0].mxu0 %v225
    %v296 = vpop.f32.mrb[0].mxu0
    %v297 = vadd.f32 0.0, %v296
    %v298 = vpop.f32.mrb[0].mxu0
    %299 = vdwg.mxu0
    %v300 = vadd.f32 %v222, %v297
    %301 = vst.msk [vmem:[#allocation2] sm:$0xff] %vm116, %v300
    // Predicated region
    $region46: #{tpu_custom_call.1} parent=1 // pred_check
      %p302 = pneg %p85
    $region47: #{tpu_custom_call.1} parent=1 // pred_check_branch
      %304 = sbr.rel (%p302) target = $region49
    $region48: #{tpu_custom_call.1} parent=1 // pred_region
      %v305 = vld [vmem:[#allocation2] sm:$0xff]
      %v306 = vadd.f32 %v305, %v99
      %307 = vst.msk [vmem:[#allocation13] sm:$0xff] %vm116, %v306
      %v308 = vsub.f32 %v101, %v306
      %v309 = vmul.f32 %v308, %v308
      %v310 = vsel %vm116, %v309, 0.0
      %311 = vadd.xlane.f32.xlu0 %v310
      %v312 = vpop.xlane.xlu0 %311
      %v313 = vmul.f32 %v312, 0.125
      %v314 = vld [vmem:[#allocation3] sm:$0xff]
      %v315 = vmul.f32 %v314, 0.01
      %v316 = vadd.f32 %v313, %v315
      %317 = vst.msk [vmem:[#allocation16] sm:$0xff] %vm220, %v316
    $region49: #{tpu_custom_call.1} parent=1 // pred_fallthru
      _
    // Predicated region
    $region50: #{tpu_custom_call.1} parent=1 // pred_check
      _
    $region51: #{tpu_custom_call.1} parent=1 // pred_check_branch
      %319 = sbr.rel (0) target = $region53
    $region52: #{tpu_custom_call.1} parent=1 // pred_region
      %s321 = ssub.s32 128, 128
      %322 = vsyncadd [#allocation6], %s321
      %s324 = sshll.u32 [#allocation13], 4
      %s325 = int_to_ptr.vmem [resolvable:$true] %s324
      %327 = dma.vmem_to_hbm [thread:$0]  %s325, 128, %s5, [#allocation6]
    $region53: #{tpu_custom_call.1} parent=1 // pred_fallthru
      _
    // Predicated region
    $region54: #{tpu_custom_call.1} parent=1 // pred_check
      _
    $region55: #{tpu_custom_call.1} parent=1 // pred_check_branch
      %329 = sbr.rel (0) target = $region57
    $region56: #{tpu_custom_call.1} parent=1 // pred_region
      %s331 = ssub.s32 128, 128
      %332 = vsyncadd [#allocation15], %s331
      %s334 = sshll.u32 [#allocation14], 4
      %s335 = int_to_ptr.vmem [resolvable:$true] %s334
      %337 = dma.vmem_to_hbm [thread:$0]  %s335, 128, %s6, [#allocation15]
    $region57: #{tpu_custom_call.1} parent=1 // pred_fallthru
      _
    // Predicated region
    $region58: #{tpu_custom_call.1} parent=1 // pred_check
      _
    $region59: #{tpu_custom_call.1} parent=1 // pred_check_branch
      %339 = sbr.rel (0) target = $region61
    $region60: #{tpu_custom_call.1} parent=1 // pred_region
      %s341 = ssub.s32 128, 128
      %342 = vsyncadd [#allocation15], %s341
      %s344 = sshll.u32 [#allocation16], 4
      %s345 = int_to_ptr.vmem [resolvable:$true] %s344
      %347 = dma.vmem_to_hbm [thread:$0]  %s345, 128, %s7, [#allocation15]
    $region61: #{tpu_custom_call.1} parent=1 // pred_fallthru
      _
    // Predicated region
    $region62: #{tpu_custom_call.1} parent=1 // pred_check
      _
    $region63: #{tpu_custom_call.1} parent=1 // pred_check_branch
      %349 = sbr.rel (0) target = $region65
    $region64: #{tpu_custom_call.1} parent=1 // pred_region
      %350 = dma.done [#allocation6], 128
    $region65: #{tpu_custom_call.1} parent=1 // pred_fallthru
      _
    // Predicated region
    $region66: #{tpu_custom_call.1} parent=1 // pred_check
      _
    $region67: #{tpu_custom_call.1} parent=1 // pred_check_branch
      %352 = sbr.rel (0) target = $region69
    $region68: #{tpu_custom_call.1} parent=1 // pred_region
      %353 = dma.done [#allocation15], 128
    $region69: #{tpu_custom_call.1} parent=1 // pred_fallthru
      _
    // Predicated region
    $region70: #{tpu_custom_call.1} parent=1 // pred_check
      _
    $region71: #{tpu_custom_call.1} parent=1 // pred_check_branch
      %355 = sbr.rel (0) target = $region73
    $region72: #{tpu_custom_call.1} parent=1 // pred_region
      %356 = dma.done [#allocation15], 128
    $region73: #{tpu_custom_call.1} parent=1 // pred_fallthru
      _
    %357 = vsyncpa [#allocation5], 1
    %358 = vsyncpa [#allocation8], 1
    %359 = vsyncpa [#allocation11], 1
    %360 = vsyncpa [#allocation6], 1
    %361 = vsyncpa [#allocation15], 1

</llo_original>
